<compile_context>
chip_gen: v7x
topology: tpu7x:2x2x1
jax: 0.10.0
libtpu: 0.0.40
codegen_flags: <defaults>
</compile_context>

<pallas_src>
import math

import jax
import jax.numpy as jnp
import numpy as np
from jax.experimental import pallas as pl
from jax.experimental.pallas import tpu as pltpu


# ----------------------------------------------------------------------------- kernel
def custom_loss_kernel(states_ref, controls_ref, reference_ref,
                       wx_ref, m1_ref, m3_ref, wu_ref, out_ref, acc_ref):
    k = pl.program_id(1)

    @pl.when(k == 0)
    def _init():
        acc_ref[...] = jnp.zeros_like(acc_ref)

    # Large blocks (upcast to f32 right after load so bf16 inputs are fine).
    x = states_ref[...].astype(jnp.float32)      # (Bc, Lx)  time folded into lanes
    u = controls_ref[...].astype(jnp.float32)    # (Bc, Lu)

    # Resident weight vectors (fetched once for the whole grid).
    wx = wx_ref[pl.ds(k, 1), :]                  # (1, Lx)  qx per step (+Qt at t=T-1, 0 on pad)
    m1 = m1_ref[...]                             # (1, Lx)  one-hot(feature 1), tiled over chunk
    m3 = m3_ref[...]                             # (1, Lx)  one-hot(feature 3), tiled over chunk
    wu = wu_ref[...]                             # (1, Lu)  qu per step

    r = reference_ref[...]                       # (Bc, 2)
    r0 = r[:, 0:1]                               # (Bc, 1)
    r1 = r[:, 1:2]                               # (Bc, 1)

    # Direct (x - ref)^2 form: reference broadcast into the lane layout via the
    # one-hot masks (better numerics than the expanded quadratic).
    diff = x - (r0 * m1 + r1 * m3)                                   # (Bc, Lx)
    partial = jnp.sum(diff * diff * wx, axis=-1, keepdims=True)      # (Bc, 1)
    partial = partial + jnp.sum(u * u * wu, axis=-1, keepdims=True)  # (Bc, 1)

    acc_ref[...] += partial

    @pl.when(k == pl.num_programs(1) - 1)
    def _store():
        out_ref[...] = acc_ref[...]


# ----------------------------------------------------------------------------- tiling helpers
def _choose_time_chunk(T, Fx, Fu, max_lane_elems=16384):
    """Pick (Tc, T_pad): chunk of whole timesteps with Tc*Fx and Tc*Fu % 128 == 0
    (unless a single full-extent chunk is small enough), minimal time padding."""
    f = max(Fx, Fu)
    if T * f <= max_lane_elems:
        return T, T                              # one full-extent chunk (no lane constraint)
    gx = 128 // math.gcd(128, Fx)
    gu = 128 // math.gcd(128, Fu)
    base = gx * gu // math.gcd(gx, gu)           # Tc must be a multiple of this
    cap = max(base, ((max_lane_elems // f) // base) * base)
    best_tc, best_pad = base, ((T + base - 1) // base) * base
    d = base
    while d <= cap:
        pad_total = ((T + d - 1) // d) * d
        if pad_total < best_pad or (pad_total == best_pad and d > best_tc):
            best_tc, best_pad = d, pad_total
        d += base
    return best_tc, best_pad


def _choose_batch_chunk(B, per_row_bytes, bytes_budget=24 * 1024 * 1024):
    """Pick (Bc, B_pad): multiple-of-8 batch block under a double-buffered byte
    budget; keep >= 2 parallel blocks when possible (v7x has 2 TensorCores)."""
    max_rows = max(8, bytes_budget // max(per_row_bytes, 1))
    if B % 8 != 0:
        if B <= max_rows:
            return B, B                          # full-extent block, no sublane constraint
        b_pad = ((B + 7) // 8) * 8
    else:
        b_pad = B
    cap = b_pad
    if b_pad % 16 == 0 and b_pad // 2 >= 8:
        cap = b_pad // 2                         # keep >= 2 blocks on the parallel axis
    cap = min(cap, max_rows)
    best, d = 8, 8
    while d <= cap:
        if b_pad % d == 0:
            best = d
        d += 8
    return best, b_pad


def _as_kernel_dtype(a):
    a = jnp.asarray(a)
    if a.dtype == jnp.bfloat16 or a.dtype == jnp.float32:
        return a
    return a.astype(jnp.float32)


# ----------------------------------------------------------------------------- wrapper
def custom_loss(states, controls, reference, qx_diag, qu_diag, qt_diag):
    """Scalar loss = mean_b( sum_t diff^T Qx diff + sum_t u^T Qu u + diff_T^T Qt diff_T )."""
    states = _as_kernel_dtype(states)
    controls = _as_kernel_dtype(controls)
    reference = jnp.asarray(reference, jnp.float32)
    qx_diag = jnp.asarray(qx_diag, jnp.float32)
    qu_diag = jnp.asarray(qu_diag, jnp.float32)
    qt_diag = jnp.asarray(qt_diag, jnp.float32)

    B, T, Fx = states.shape
    Fu = controls.shape[-1]
    # The module hard-codes reference column 0 -> state feature 1, column 1 -> feature 3.
    assert Fx >= 4, "state feature dim must be >= 4 (reference maps to features 1 and 3)"
    assert reference.shape == (B, 2)
    assert qx_diag.shape == (Fx,) and qt_diag.shape == (Fx,) and qu_diag.shape == (Fu,)

    # ---- tiling ----
    Tc, T_pad = _choose_time_chunk(T, Fx, Fu)
    per_row_bytes = 2 * Tc * (Fx * states.dtype.itemsize + Fu * controls.dtype.itemsize)
    Bc, B_pad = _choose_batch_chunk(B, per_row_bytes)
    nt = T_pad // Tc
    nb = B_pad // Bc
    Lx, Lu = Tc * Fx, Tc * Fu

    # ---- padding (zeros contribute nothing: padded wx rows are zeroed, padded u is zero) ----
    if T_pad != T or B_pad != B:
        states = jnp.pad(states, ((0, B_pad - B), (0, T_pad - T), (0, 0)))
        controls = jnp.pad(controls, ((0, B_pad - B), (0, T_pad - T), (0, 0)))
        reference = jnp.pad(reference, ((0, B_pad - B), (0, 0)))

    # ---- lane-dense layout ----
    x_flat = states.reshape(B_pad, T_pad * Fx)
    u_flat = controls.reshape(B_pad, T_pad * Fu)

    # ---- small resident weight vectors ----
    wx2d = jnp.tile(qx_diag[None, :], (T, 1)).at[T - 1].add(qt_diag)    # Qt folded at t=T-1
    wx2d = jnp.pad(wx2d, ((0, T_pad - T), (0, 0)))                      # zero weight on pad
    wx = wx2d.reshape(nt, Lx)                                           # per-chunk rows
    m1 = jnp.tile((jnp.arange(Fx) == 1).astype(jnp.float32), (Tc,)).reshape(1, Lx)
    m3 = jnp.tile((jnp.arange(Fx) == 3).astype(jnp.float32), (Tc,)).reshape(1, Lx)
    wu = jnp.tile(qu_diag, (Tc,)).reshape(1, Lu)

    per_batch = pl.pallas_call(
        custom_loss_kernel,
        out_shape=jax.ShapeDtypeStruct((B_pad, 1), jnp.float32),
        grid_spec=pltpu.PrefetchScalarGridSpec(
            num_scalar_prefetch=0,
            grid=(nb, nt),
            in_specs=[
                pl.BlockSpec((Bc, Lx), lambda bi, k: (bi, k)),   # states (lane-dense)
                pl.BlockSpec((Bc, Lu), lambda bi, k: (bi, k)),   # controls (lane-dense)
                pl.BlockSpec((Bc, 2), lambda bi, k: (bi, 0)),    # reference
                pl.BlockSpec((nt, Lx), lambda bi, k: (0, 0)),    # wx (resident, sliced by k)
                pl.BlockSpec((1, Lx), lambda bi, k: (0, 0)),     # m1 (resident)
                pl.BlockSpec((1, Lx), lambda bi, k: (0, 0)),     # m3 (resident)
                pl.BlockSpec((1, Lu), lambda bi, k: (0, 0)),     # wu (resident)
            ],
            out_specs=pl.BlockSpec((Bc, 1), lambda bi, k: (bi, 0)),
            scratch_shapes=[pltpu.VMEM((Bc, 1), jnp.float32)],
        ),
        compiler_params=pltpu.CompilerParams(
            dimension_semantics=("parallel", "arbitrary"),
            vmem_limit_bytes=48 * 1024 * 1024,
        ),
    )(x_flat, u_flat, reference, wx, m1, m3, wu)

    # Final mean over the (unpadded) batch; padded rows are exactly zero anyway.
    return jnp.sum(per_batch[:B, 0]) / B


# ----------------------------------------------------------------------------- reference
def custom_loss_ref(states, controls, reference, qx_diag, qu_diag, qt_diag):
    """Pure-JAX reference mirroring the PyTorch forward semantics."""
    states = jnp.asarray(states, jnp.float32)
    controls = jnp.asarray(controls, jnp.float32)
    reference = jnp.asarray(reference, jnp.float32)
    ref_ext = jnp.zeros_like(states)
    ref_ext = ref_ext.at[:, :, 1].set(reference[:, 0][:, None])
    ref_ext = ref_ext.at[:, :, 3].set(reference[:, 1][:, None])
    diff = states - ref_ext
    state_loss = jnp.sum(jnp.einsum('btf,f,btf->bt', diff, qx_diag, diff), axis=1)
    control_loss = jnp.sum(jnp.einsum('btf,f,btf->bt', controls, qu_diag, controls), axis=1)
    term = diff[:, -1, :]
    terminal_loss = jnp.einsum('bf,f,bf->b', term, qt_diag, term)
    return jnp.mean(state_loss + control_loss + terminal_loss)


# ----------------------------------------------------------------------------- test
if __name__ == "__main__":
    # Deterministic Q diagonals (the module's __init__ takes Qx/Qu/Qt value lists).
    qx_diag = jnp.array([1.0, 2.0, 0.5, 3.0], dtype=jnp.float32)
    qu_diag = jnp.array([0.1, 0.25], dtype=jnp.float32)
    qt_diag = jnp.array([5.0, 5.0, 5.0, 5.0], dtype=jnp.float32)

    # Small shapes implied by the module (4 states, 2 controls, short horizon).
    B, T, Fx, Fu = 2, 8, 4, 2
    k1, k2, k3 = jax.random.split(jax.random.PRNGKey(0), 3)
    states = jax.random.normal(k1, (B, T, Fx), dtype=jnp.float32)
    controls = jax.random.normal(k2, (B, T, Fu), dtype=jnp.float32)
    reference = jax.random.normal(k3, (B, 2), dtype=jnp.float32)

    out = jax.block_until_ready(
        custom_loss(states, controls, reference, qx_diag, qu_diag, qt_diag))
    expected = custom_loss_ref(states, controls, reference, qx_diag, qu_diag, qt_diag)
    np.testing.assert_allclose(np.asarray(out), np.asarray(expected),
                               rtol=1e-5, atol=1e-5)

    # Larger shapes: exercise the gridded path (2 batch-parallel blocks + 2 time
    # chunks with the resident accumulator).
    B2, T2 = 16, 6144
    kk1, kk2, kk3 = jax.random.split(jax.random.PRNGKey(1), 3)
    states2 = jax.random.normal(kk1, (B2, T2, Fx), dtype=jnp.float32)
    controls2 = jax.random.normal(kk2, (B2, T2, Fu), dtype=jnp.float32)
    reference2 = jax.random.normal(kk3, (B2, 2), dtype=jnp.float32)

    out2 = jax.block_until_ready(
        custom_loss(states2, controls2, reference2, qx_diag, qu_diag, qt_diag))
    expected2 = custom_loss_ref(states2, controls2, reference2, qx_diag, qu_diag, qt_diag)
    np.testing.assert_allclose(np.asarray(out2), np.asarray(expected2),
                               rtol=5e-4, atol=1e-2)

    print("KERNEL_OK")
</pallas_src>

<mosaic_0001>
module attributes {stable_mosaic.version = 11 : i64} {
  func.func @custom_loss_kernel(%arg0: i32, %arg1: i32, %arg2: memref<2x32xf32, #tpu.memory_space<vmem>>, %arg3: memref<2x16xf32, #tpu.memory_space<vmem>>, %arg4: memref<2x2xf32, #tpu.memory_space<vmem>>, %arg5: memref<1x32xf32, #tpu.memory_space<vmem>>, %arg6: memref<1x32xf32, #tpu.memory_space<vmem>>, %arg7: memref<1x32xf32, #tpu.memory_space<vmem>>, %arg8: memref<1x16xf32, #tpu.memory_space<vmem>>, %arg9: memref<2x1xf32, #tpu.memory_space<vmem>>, %arg10: memref<2x1xf32, #tpu.memory_space<vmem>>) attributes {dimension_semantics = [#tpu.dimension_semantics<parallel>, #tpu.dimension_semantics<arbitrary>], iteration_bounds = array<i64: 1, 1>, scalar_prefetch = 0 : i64, scratch_operands = 1 : i64, tpu.core_type = #tpu.core_type<tc>, window_params = [{transform_indices = @transform_0, window_bounds = array<i64: 2, 32>}, {transform_indices = @transform_1, window_bounds = array<i64: 2, 16>}, {transform_indices = @transform_2, window_bounds = array<i64: 2, 2>}, {pipeline_mode = #tpu.pipeline_mode<synchronous>, transform_indices = @transform_3, window_bounds = array<i64: 1, 32>}, {pipeline_mode = #tpu.pipeline_mode<synchronous>, transform_indices = @transform_4, window_bounds = array<i64: 1, 32>}, {pipeline_mode = #tpu.pipeline_mode<synchronous>, transform_indices = @transform_5, window_bounds = array<i64: 1, 32>}, {pipeline_mode = #tpu.pipeline_mode<synchronous>, transform_indices = @transform_6, window_bounds = array<i64: 1, 16>}, {transform_indices = @transform_7, window_bounds = array<i64: 2, 1>}]} {
    %c0_i32 = arith.constant 0 : i32
    %0 = arith.cmpi eq, %arg1, %c0_i32 : i32
    %1 = arith.extui %0 : i1 to i32
    %c0_i32_0 = arith.constant 0 : i32
    %2 = arith.cmpi ne, %1, %c0_i32_0 : i32
    scf.if %2 {
      %cst_20 = arith.constant 0.000000e+00 : f32
      %38 = vector.broadcast %cst_20 : f32 to vector<2x1xf32>
      %c0_21 = arith.constant 0 : index
      %c0_22 = arith.constant 0 : index
      %39 = vector.load %arg10[%c0_21, %c0_22] : memref<2x1xf32, #tpu.memory_space<vmem>>, vector<2x1xf32>
      tpu.vector_store %arg10[%c0_21, %c0_22], %38 {strides = array<i32>} : memref<2x1xf32, #tpu.memory_space<vmem>>, vector<2x1xf32>,
    } else {
    }
    %c0 = arith.constant 0 : index
    %c0_1 = arith.constant 0 : index
    %3 = vector.load %arg2[%c0, %c0_1] : memref<2x32xf32, #tpu.memory_space<vmem>>, vector<2x32xf32>
    %c0_2 = arith.constant 0 : index
    %c0_3 = arith.constant 0 : index
    %4 = vector.load %arg3[%c0_2, %c0_3] : memref<2x16xf32, #tpu.memory_space<vmem>>, vector<2x16xf32>
    %5 = arith.index_cast %arg1 : i32 to index
    %c0_4 = arith.constant 0 : index
    %6 = vector.load %arg5[%5, %c0_4] : memref<1x32xf32, #tpu.memory_space<vmem>>, vector<1x32xf32>
    %c0_5 = arith.constant 0 : index
    %c0_6 = arith.constant 0 : index
    %7 = vector.load %arg6[%c0_5, %c0_6] : memref<1x32xf32, #tpu.memory_space<vmem>>, vector<1x32xf32>
    %c0_7 = arith.constant 0 : index
    %c0_8 = arith.constant 0 : index
    %8 = vector.load %arg7[%c0_7, %c0_8] : memref<1x32xf32, #tpu.memory_space<vmem>>, vector<1x32xf32>
    %c0_9 = arith.constant 0 : index
    %c0_10 = arith.constant 0 : index
    %9 = vector.load %arg8[%c0_9, %c0_10] : memref<1x16xf32, #tpu.memory_space<vmem>>, vector<1x16xf32>
    %c0_11 = arith.constant 0 : index
    %c0_12 = arith.constant 0 : index
    %10 = vector.load %arg4[%c0_11, %c0_12] : memref<2x2xf32, #tpu.memory_space<vmem>>, vector<2x2xf32>
    %11 = vector.extract_strided_slice %10 {offsets = [0, 0], sizes = [2, 1], strides = [1, 1]} : vector<2x2xf32> to vector<2x1xf32>
    %12 = vector.extract_strided_slice %10 {offsets = [0, 1], sizes = [2, 1], strides = [1, 1]} : vector<2x2xf32> to vector<2x1xf32>
    %13 = vector.broadcast %11 : vector<2x1xf32> to vector<2x32xf32>
    %14 = vector.broadcast %7 : vector<1x32xf32> to vector<2x32xf32>
    %15 = arith.mulf %13, %14 : vector<2x32xf32>
    %16 = vector.broadcast %12 : vector<2x1xf32> to vector<2x32xf32>
    %17 = vector.broadcast %8 : vector<1x32xf32> to vector<2x32xf32>
    %18 = arith.mulf %16, %17 : vector<2x32xf32>
    %19 = arith.addf %15, %18 : vector<2x32xf32>
    %20 = arith.subf %3, %19 : vector<2x32xf32>
    %21 = arith.mulf %20, %20 : vector<2x32xf32>
    %22 = vector.broadcast %6 : vector<1x32xf32> to vector<2x32xf32>
    %23 = arith.mulf %21, %22 : vector<2x32xf32>
    %cst = arith.constant dense<0.000000e+00> : vector<2xf32>
    %24 = vector.multi_reduction <add>, %23, %cst [1] : vector<2x32xf32> to vector<2xf32>
    %25 = vector.shape_cast %24 : vector<2xf32> to vector<2x1xf32>
    %26 = arith.mulf %4, %4 : vector<2x16xf32>
    %27 = vector.broadcast %9 : vector<1x16xf32> to vector<2x16xf32>
    %28 = arith.mulf %26, %27 : vector<2x16xf32>
    %cst_13 = arith.constant dense<0.000000e+00> : vector<2xf32>
    %29 = vector.multi_reduction <add>, %28, %cst_13 [1] : vector<2x16xf32> to vector<2xf32>
    %30 = vector.shape_cast %29 : vector<2xf32> to vector<2x1xf32>
    %31 = arith.addf %25, %30 : vector<2x1xf32>
    %c0_14 = arith.constant 0 : index
    %c0_15 = arith.constant 0 : index
    %32 = vector.load %arg10[%c0_14, %c0_15] : memref<2x1xf32, #tpu.memory_space<vmem>>, vector<2x1xf32>
    %33 = arith.addf %32, %31 : vector<2x1xf32>
    %c0_16 = arith.constant 0 : index
    %c0_17 = arith.constant 0 : index
    %34 = vector.load %arg10[%c0_16, %c0_17] : memref<2x1xf32, #tpu.memory_space<vmem>>, vector<2x1xf32>
    tpu.vector_store %arg10[%c0_16, %c0_17], %33 {strides = array<i32>} : memref<2x1xf32, #tpu.memory_space<vmem>>, vector<2x1xf32>,
    %c0_i32_18 = arith.constant 0 : i32
    %35 = arith.cmpi eq, %arg1, %c0_i32_18 : i32
    %36 = arith.extui %35 : i1 to i32
    %c0_i32_19 = arith.constant 0 : i32
    %37 = arith.cmpi ne, %36, %c0_i32_19 : i32
    scf.if %37 {
      %c0_20 = arith.constant 0 : index
      %c0_21 = arith.constant 0 : index
      %38 = vector.load %arg10[%c0_20, %c0_21] : memref<2x1xf32, #tpu.memory_space<vmem>>, vector<2x1xf32>
      %c0_22 = arith.constant 0 : index
      %c0_23 = arith.constant 0 : index
      %39 = vector.load %arg9[%c0_22, %c0_23] : memref<2x1xf32, #tpu.memory_space<vmem>>, vector<2x1xf32>
      tpu.vector_store %arg9[%c0_22, %c0_23], %38 {strides = array<i32>} : memref<2x1xf32, #tpu.memory_space<vmem>>, vector<2x1xf32>,
    } else {
    }
    return
  }
  func.func @transform_0(%arg0: i32, %arg1: i32) -> (i32, i32) {
    %c0_i32 = arith.constant 0 : i32
    return %arg0, %arg1 : i32, i32
  }
  func.func @transform_1(%arg0: i32, %arg1: i32) -> (i32, i32) {
    %c0_i32 = arith.constant 0 : i32
    return %arg0, %arg1 : i32, i32
  }
  func.func @transform_2(%arg0: i32, %arg1: i32) -> (i32, i32) {
    %c0_i32 = arith.constant 0 : i32
    %c0_i32_0 = arith.constant 0 : i32
    return %arg0, %c0_i32 : i32, i32
  }
  func.func @transform_3(%arg0: i32, %arg1: i32) -> (i32, i32) {
    %c0_i32 = arith.constant 0 : i32
    %c0_i32_0 = arith.constant 0 : i32
    %c0_i32_1 = arith.constant 0 : i32
    return %c0_i32, %c0_i32_0 : i32, i32
  }
  func.func @transform_4(%arg0: i32, %arg1: i32) -> (i32, i32) {
    %c0_i32 = arith.constant 0 : i32
    %c0_i32_0 = arith.constant 0 : i32
    %c0_i32_1 = arith.constant 0 : i32
    return %c0_i32, %c0_i32_0 : i32, i32
  }
  func.func @transform_5(%arg0: i32, %arg1: i32) -> (i32, i32) {
    %c0_i32 = arith.constant 0 : i32
    %c0_i32_0 = arith.constant 0 : i32
    %c0_i32_1 = arith.constant 0 : i32
    return %c0_i32, %c0_i32_0 : i32, i32
  }
  func.func @transform_6(%arg0: i32, %arg1: i32) -> (i32, i32) {
    %c0_i32 = arith.constant 0 : i32
    %c0_i32_0 = arith.constant 0 : i32
    %c0_i32_1 = arith.constant 0 : i32
    return %c0_i32, %c0_i32_0 : i32, i32
  }
  func.func @transform_7(%arg0: i32, %arg1: i32) -> (i32, i32) {
    %c0_i32 = arith.constant 0 : i32
    %c0_i32_0 = arith.constant 0 : i32
    return %arg0, %c0_i32 : i32, i32
  }
}

</mosaic_0001>

<llo_original>
// kernel: tpu_custom_call.1
$region0: #{tpu_custom_call.1}
  #allocation0 [shape = 'u32[]', space=smem, size = 0x4, offset = 0x4, fixed_abs, tag = 'smem constant byte address 0x4 - core index']
  #allocation1 [shape = 'u32[144,128]{1,0:T(1,128)}', space=vmem, size = 0x12000, scoped, tag = 'internal scratch']
  #allocation2 [shape = 'f32[2,1]{1,0:T(2,128)}', space=vmem, size = 0x400, scoped, tag = 'scratch operand']
  %s0 = inlined_call_operand.hbm [shape: f32[2,32], index: 0, kind: input, shape index: {}]
  %s1 = inlined_call_operand.vmem [shape: f32[2,16], index: 1, kind: input, shape index: {}]
  %s2 = inlined_call_operand.vmem [shape: f32[2,2], index: 2, kind: input, shape index: {}]
  %s3 = inlined_call_operand.vmem [shape: f32[1,32], index: 3, kind: input, shape index: {}]
  %s4 = inlined_call_operand.vmem [shape: f32[1,32], index: 4, kind: input, shape index: {}]
  %s5 = inlined_call_operand.vmem [shape: f32[1,32], index: 5, kind: input, shape index: {}]
  %s6 = inlined_call_operand.vmem [shape: f32[1,16], index: 6, kind: input, shape index: {}]
  %s7 = inlined_call_operand.vmem [shape: f32[2,1], index: 7, kind: output, shape index: {}]
  %s8 = sld [smem:[#allocation0]]
  $region50: #{tpu_custom_call.1} parent=0
    _
  %s10 = ssub.s32 1, %s8
  %s11 = scalar_select 0, %s10, %s8
  $region1: #{tpu_custom_call.1} parent=0
    #allocation3 [shape = 'u8[1024]{0}', space=vmem, size = 0x400, scoped, tag = 'input window, operand 0, single buffered']
    #allocation4 [shape = 's32[1]{0}', space=sflag, size = 0x4, scoped, tag = 'scoped memory for tpu_custom_call.1']
    %12 = vsyncpa [#allocation4], 0
    // Predicated region
    $region2: #{tpu_custom_call.1} parent=1 // pred_check
      _
    $region3: #{tpu_custom_call.1} parent=1 // pred_check_branch
      %14 = sbr.rel (0) target = $region5
    $region4: #{tpu_custom_call.1} parent=1 // pred_region
      %s16 = ssub.s32 32, 32
      %17 = vsyncadd [#allocation4], %s16
      %s19 = sshll.u32 [#allocation3], 4
      %s20 = int_to_ptr.vmem [resolvable:$true] %s19
      %22 = dma.hbm_to_vmem [thread:$0]  %s0, 32, %s20, [#allocation4]
    $region5: #{tpu_custom_call.1} parent=1 // pred_fallthru
      _
    // Predicated region
    $region6: #{tpu_custom_call.1} parent=1 // pred_check
      _
    $region7: #{tpu_custom_call.1} parent=1 // pred_check_branch
      %24 = sbr.rel (0) target = $region9
    $region8: #{tpu_custom_call.1} parent=1 // pred_region
      _
    $region9: #{tpu_custom_call.1} parent=1 // pred_fallthru
      _
    // Predicated region
    $region10: #{tpu_custom_call.1} parent=1 // pred_check
      _
    $region11: #{tpu_custom_call.1} parent=1 // pred_check_branch
      %26 = sbr.rel (0) target = $region13
    $region12: #{tpu_custom_call.1} parent=1 // pred_region
      _
    $region13: #{tpu_custom_call.1} parent=1 // pred_fallthru
      _
    // Predicated region
    $region14: #{tpu_custom_call.1} parent=1 // pred_check
      _
    $region15: #{tpu_custom_call.1} parent=1 // pred_check_branch
      %28 = sbr.rel (0) target = $region17
    $region16: #{tpu_custom_call.1} parent=1 // pred_region
      _
    $region17: #{tpu_custom_call.1} parent=1 // pred_fallthru
      _
    // Predicated region
    $region18: #{tpu_custom_call.1} parent=1 // pred_check
      _
    $region19: #{tpu_custom_call.1} parent=1 // pred_check_branch
      %30 = sbr.rel (0) target = $region21
    $region20: #{tpu_custom_call.1} parent=1 // pred_region
      _
    $region21: #{tpu_custom_call.1} parent=1 // pred_fallthru
      _
    // Predicated region
    $region22: #{tpu_custom_call.1} parent=1 // pred_check
      _
    $region23: #{tpu_custom_call.1} parent=1 // pred_check_branch
      %32 = sbr.rel (0) target = $region25
    $region24: #{tpu_custom_call.1} parent=1 // pred_region
      _
    $region25: #{tpu_custom_call.1} parent=1 // pred_fallthru
      _
    // Predicated region
    $region26: #{tpu_custom_call.1} parent=1 // pred_check
      _
    $region27: #{tpu_custom_call.1} parent=1 // pred_check_branch
      %34 = sbr.rel (0) target = $region29
    $region28: #{tpu_custom_call.1} parent=1 // pred_region
      _
    $region29: #{tpu_custom_call.1} parent=1 // pred_fallthru
      _
    // Predicated region
    $region30: #{tpu_custom_call.1} parent=1 // pred_check
      _
    $region31: #{tpu_custom_call.1} parent=1 // pred_check_branch
      %36 = sbr.rel (0) target = $region33
    $region32: #{tpu_custom_call.1} parent=1 // pred_region
      %37 = dma.done [#allocation4], 32
    $region33: #{tpu_custom_call.1} parent=1 // pred_fallthru
      _
    %p38 = scmp.eq.s32.totalorder 0, 0
    // Predicated region
    $region34: #{tpu_custom_call.1} parent=1 // pred_check
      %p39 = pneg %p38
    $region35: #{tpu_custom_call.1} parent=1 // pred_check_branch
      %41 = sbr.rel (%p39) target = $region37
    $region36: #{tpu_custom_call.1} parent=1 // pred_region
      %vm42 = vcmask 1024
      %43 = vst.msk [vmem:[#allocation2] sm:$0x3] %vm42, 0.0
    $region37: #{tpu_custom_call.1} parent=1 // pred_fallthru
      _
    %v44 = vld [vmem:[#allocation3] sm:$0x3]
    %v45 = vld [vmem:[%s1] sm:$0x3]
    %v46 = vld [vmem:[%s3] sm:$0x1]
    %v47 = vld [vmem:[%s4] sm:$0x1]
    %v48 = vld [vmem:[%s5] sm:$0x1]
    %v49 = vld [vmem:[%s6] sm:$0x1]
    %v50 = vld [vmem:[%s2] sm:$0x3]
    %52 = vset.pattern.permute.xlu0 0
    %53 = vperm.xlu0 %52, %v50
    %v54 = vpop.permute.xlu0 %53
    %v57 = vlaneseq
    %v58 = vshrl.u32 %v57, 7
    %v59 = vsub.s32 0, %v58
    %v60 = vrot.slane %v47, %v59
    %v62 = vmul.f32 %v54, %v60
    %63 = vset.pattern.permute.xlu0 1
    %64 = vperm.xlu0 %63, %v50
    %v65 = vpop.permute.xlu0 %64
    %v68 = vlaneseq
    %v69 = vshrl.u32 %v68, 7
    %v70 = vsub.s32 0, %v69
    %v71 = vrot.slane %v48, %v70
    %v73 = vmul.f32 %v65, %v71
    %v74 = vadd.f32 %v62, %v73
    %v75 = vsub.f32 %v44, %v74
    %v76 = vmul.f32 %v75, %v75
    %v78 = vlaneseq
    %v79 = vshrl.u32 %v78, 7
    %v80 = vsub.s32 0, %v79
    %v81 = vrot.slane %v46, %v80
    %v83 = vmul.f32 %v76, %v81
    %vm84 = vcmask 254976
    %v85 = vsel %vm84, %v83, 0.0
    %86 = vadd.xlane.f32.xlu0 %v85
    %v87 = vpop.xlane.xlu0 %86
    %v88 = vmul.f32 %v45, %v45
    %v90 = vlaneseq
    %v91 = vshrl.u32 %v90, 7
    %v92 = vsub.s32 0, %v91
    %v93 = vrot.slane %v49, %v92
    %v95 = vmul.f32 %v88, %v93
    %vm96 = vcmask 123904
    %v97 = vsel %vm96, %v95, 0.0
    %98 = vadd.xlane.f32.xlu0 %v97
    %v99 = vpop.xlane.xlu0 %98
    %v100 = vadd.f32 %v87, %v99
    %v101 = vld [vmem:[#allocation2] sm:$0x3]
    %v102 = vadd.f32 %v101, %v100
    %vm103 = vcmask 1024
    %104 = vst.msk [vmem:[#allocation2] sm:$0x3] %vm103, %v102
    // Predicated region
    $region38: #{tpu_custom_call.1} parent=1 // pred_check
      %p105 = pneg %p38
    $region39: #{tpu_custom_call.1} parent=1 // pred_check_branch
      %107 = sbr.rel (%p105) target = $region41
    $region40: #{tpu_custom_call.1} parent=1 // pred_region
      %v108 = vld [vmem:[#allocation2] sm:$0x3]
      %109 = vst.msk [vmem:[%s7] sm:$0x3] %vm103, %v108
    $region41: #{tpu_custom_call.1} parent=1 // pred_fallthru
      _
    // Predicated region
    $region42: #{tpu_custom_call.1} parent=1 // pred_check
      _
    $region43: #{tpu_custom_call.1} parent=1 // pred_check_branch
      %111 = sbr.rel (0) target = $region45
    $region44: #{tpu_custom_call.1} parent=1 // pred_region
      _
    $region45: #{tpu_custom_call.1} parent=1 // pred_fallthru
      _
    // Predicated region
    $region46: #{tpu_custom_call.1} parent=1 // pred_check
      _
    $region47: #{tpu_custom_call.1} parent=1 // pred_check_branch
      %113 = sbr.rel (0) target = $region49
    $region48: #{tpu_custom_call.1} parent=1 // pred_region
      _
    $region49: #{tpu_custom_call.1} parent=1 // pred_fallthru
      _
    %114 = vsyncpa [#allocation4], 1

</llo_original>
